<compile_context>
chip_gen: v7x
topology: tpu7x:2x2x1
jax: 0.10.0
libtpu: 0.0.40
codegen_flags: <defaults>
</compile_context>

<pallas_src>
import math

import jax
import jax.numpy as jnp
from jax.experimental import pallas as pl
from jax.experimental.pallas import tpu as pltpu


# ----------------------------- helpers --------------------------------------

def _round_up(n, m):
    return ((n + m - 1) // m) * m


def _nbytes(a):
    return a.size * a.dtype.itemsize


def _supports_single_buffer():
    """Probe pipeline_mode=pl.Buffered(1) availability (constructor only)."""
    try:
        pl.BlockSpec((8, 128), lambda i: (0, 0), pipeline_mode=pl.Buffered(1))
        return True
    except (TypeError, AttributeError):
        return False


_HAS_BUFFERED = _supports_single_buffer()


def _const_spec(shape):
    """Grid-invariant (weight/bias) block: single-buffered when supported."""
    if _HAS_BUFFERED:
        return pl.BlockSpec(shape, lambda i: (0, 0), pipeline_mode=pl.Buffered(1))
    return pl.BlockSpec(shape, lambda i: (0, 0))


# ----------------------------- activations ---------------------------------

_RRELU_SLOPE = (1.0 / 8.0 + 1.0 / 3.0) / 2.0  # torch RReLU eval-mode slope


def _softsign_kernel(x):
    # approx reciprocal -> single EUP op (slot with slack) instead of a divide
    xf = x.astype(jnp.float32)
    return (xf * pl.reciprocal(1.0 + jnp.abs(xf), approx=True)).astype(x.dtype)


def _softsign_ref(x):
    return x / (1.0 + jnp.abs(x))


def _softplus(x):
    return jnp.logaddexp(x, 0.0)


def _tanhshrink(x):
    return x - jnp.tanh(x)


def _relu(x):
    return jnp.maximum(x, 0.0)


def _rrelu_eval(x):
    # TODO(synk): RReLU training-mode randomized slope not reproduced.
    return jnp.where(x >= 0, x, _RRELU_SLOPE * x)


_KERNEL_ACTIVATIONS = {
    0: _softsign_kernel,
    1: _softplus,
    2: jnp.tanh,
    3: _tanhshrink,
    4: _relu,
    5: _rrelu_eval,
}

_REF_ACTIVATIONS = {
    0: _softsign_ref,
    1: _softplus,
    2: jnp.tanh,
    3: _tanhshrink,
    4: _relu,
    5: _rrelu_eval,
}


# ------------------------------- kernel -------------------------------------

def _make_mlp_kernel(num_layers, act_fn, act_dtype):
    def kernel(*refs):
        # refs = (x, W0..W_{L-1}, b0..b_{L-1}, out)
        x_ref = refs[0]
        w_refs = refs[1:1 + num_layers]
        b_refs = refs[1 + num_layers:1 + 2 * num_layers]
        out_ref = refs[-1]

        h = x_ref[...]
        for i in range(num_layers):
            # MXU matmul with (bf16|f32) operands, f32 accumulation.
            h = jnp.dot(h.astype(w_refs[i].dtype), w_refs[i][...],
                        preferred_element_type=jnp.float32)
            h = h + b_refs[i][...]            # bias add in f32
            if i < num_layers - 1:
                # Apply the activation on the dtype the next matmul consumes
                # (bf16 when use_bf16): halves VPU/EUP work and vreg traffic.
                h = act_fn(h.astype(act_dtype))
        out_ref[...] = h.astype(out_ref.dtype)

    return kernel


# --------------------------- parameter prep ----------------------------------

def prepare_params(weights, biases, use_bf16=True):
    """Pad hidden dims to 128 lanes and cast weights once (hoisted out of the
    per-call forward path).  In/out feature dims (4) are kept exact.

    weights: list of (in_i, out_i) float32 arrays (transposed vs. PyTorch).
    biases:  list of (1, out_i) float32 arrays.
    """
    compute_dtype = jnp.bfloat16 if use_bf16 else jnp.float32
    num_layers = len(weights)
    in_dim = weights[0].shape[0]
    out_dim = weights[-1].shape[1]

    dims = [in_dim] + [w.shape[1] for w in weights]
    pdims = list(dims)
    for i in range(1, num_layers):          # pad hidden dims only
        pdims[i] = _round_up(dims[i], 128)

    w_p, b_p = [], []
    for i, (w, b) in enumerate(zip(weights, biases)):
        # Padded rows/cols are ZERO (exactness invariant, see header comment).
        wp = jnp.zeros((pdims[i], pdims[i + 1]), compute_dtype)
        wp = wp.at[:w.shape[0], :w.shape[1]].set(w.astype(compute_dtype))
        bp = jnp.zeros((1, pdims[i + 1]), jnp.float32)
        bp = bp.at[:, :b.shape[1]].set(b.astype(jnp.float32))
        w_p.append(wp)
        b_p.append(bp)

    return {"w": w_p, "b": b_p, "in_dim": in_dim, "out_dim": out_dim,
            "dtype": compute_dtype}


# ------------------------------- wrapper -------------------------------------

def mlp_forward_prepared(x, params, activation_function, *, batch_tile=512):
    """Full MLP forward pass as one Pallas kernel, using prepared params."""
    if activation_function not in _KERNEL_ACTIVATIONS:
        raise ValueError("Invalid activation function identifier")
    act_fn = _KERNEL_ACTIVATIONS[activation_function]

    w_p, b_p = params["w"], params["b"]
    in_dim, out_dim = params["in_dim"], params["out_dim"]
    compute_dtype = params["dtype"]
    num_layers = len(w_p)

    B, xin = x.shape
    assert xin == in_dim, "input feature dim mismatch"

    # --- batch tile: multiple of the sublane packing; guarantee >= 2 grid
    # steps whenever B allows so v7x can shard the grid over both TCs. -------
    sublane = 16 if compute_dtype == jnp.bfloat16 else 8
    half = _round_up(max(1, -(-B // 2)), sublane)
    bt = max(sublane, min(_round_up(batch_tile, sublane), half))
    B_pad = _round_up(B, bt)
    grid = (B_pad // bt,)

    x_p = jnp.zeros((B_pad, in_dim), compute_dtype)
    x_p = x_p.at[:B, :].set(x.astype(compute_dtype))

    # --- VMEM budget: single-buffered params + double-buffered I/O tiles +
    # in-flight activations, clamped to the chip's actual capacity. ----------
    param_factor = 1 if _HAS_BUFFERED else 2
    param_bytes = sum(_nbytes(a) for a in w_p) + sum(_nbytes(a) for a in b_p)
    max_pdim = max(w.shape[1] for w in w_p)
    io_bytes = 2 * (bt * in_dim * x_p.dtype.itemsize + bt * out_dim * 4)
    act_bytes = 3 * bt * max_pdim * 4
    needed = param_factor * param_bytes + io_bytes + act_bytes + (4 << 20)
    try:
        cap = int(pltpu.get_tpu_info().vmem_capacity_bytes)
    except Exception:
        cap = 64 << 20  # conservative fallback (v7x per-TC capacity)
    vmem_limit = int(min(cap - (8 << 20), max(32 << 20, needed)))

    # --- specs ---------------------------------------------------------------
    x_spec = pl.BlockSpec((bt, in_dim), lambda i: (i, 0))
    w_specs = [_const_spec(w.shape) for w in w_p]
    b_specs = [_const_spec(b.shape) for b in b_p]
    out_spec = pl.BlockSpec((bt, out_dim), lambda i: (i, 0))

    kernel = _make_mlp_kernel(num_layers, act_fn, compute_dtype)

    out_padded = pl.pallas_call(
        kernel,
        out_shape=jax.ShapeDtypeStruct((B_pad, out_dim), jnp.float32),
        grid_spec=pltpu.PrefetchScalarGridSpec(
            num_scalar_prefetch=0,
            grid=grid,
            in_specs=[x_spec] + w_specs + b_specs,
            out_specs=out_spec,
        ),
        compiler_params=pltpu.CompilerParams(
            dimension_semantics=("parallel",),
            vmem_limit_bytes=vmem_limit,
        ),
    )(x_p, *w_p, *b_p)

    return out_padded[:B, :]


def mlp_forward(x, weights, biases, activation_function, *,
                batch_tile=512, use_bf16=True):
    """Convenience wrapper (prepares params per call; prefer prepare_params
    once + mlp_forward_prepared in a loop)."""
    params = prepare_params(weights, biases, use_bf16=use_bf16)
    return mlp_forward_prepared(x, params, activation_function,
                                batch_tile=batch_tile)


# --------------------------- parameter init ---------------------------------

def init_net_params(key, hidden_layers, nodes_per_layer):
    """Deterministic init mirroring torch.nn.Linear default (uniform bound
    1/sqrt(fan_in) for weight and bias). Weights are (in_features, out_features)."""
    dims = [4] + [nodes_per_layer] * (hidden_layers + 1) + [4]
    weights, biases = [], []
    for i in range(len(dims) - 1):
        fan_in, fan_out = dims[i], dims[i + 1]
        key, kw, kb = jax.random.split(key, 3)
        bound = 1.0 / math.sqrt(fan_in)
        w = jax.random.uniform(kw, (fan_in, fan_out), jnp.float32,
                               minval=-bound, maxval=bound)
        b = jax.random.uniform(kb, (1, fan_out), jnp.float32,
                               minval=-bound, maxval=bound)
        weights.append(w)
        biases.append(b)
    return weights, biases


# ----------------------------- reference ------------------------------------

def mlp_reference(x, weights, biases, activation_function):
    act_fn = _REF_ACTIVATIONS[activation_function]
    h = x
    for i, (w, b) in enumerate(zip(weights, biases)):
        h = h @ w + b
        if i < len(weights) - 1:
            h = act_fn(h)
    return h


# -------------------------------- main ---------------------------------------

if __name__ == "__main__":
    hidden_layers = 2
    nodes_per_layer = 32
    activation_function = 2  # Tanh

    key = jax.random.PRNGKey(0)
    key, kx = jax.random.split(key)

    # Ragged batch to exercise pad/slice handling and a multi-step grid.
    B = 300
    x = jax.random.normal(kx, (B, 4), dtype=jnp.float32)

    weights, biases = init_net_params(key, hidden_layers, nodes_per_layer)
    ref = mlp_reference(x, weights, biases, activation_function)

    # --- exact f32 path (for PINN-style training accuracy) -------------------
    params_f32 = prepare_params(weights, biases, use_bf16=False)
    out_f32 = mlp_forward_prepared(x, params_f32, activation_function,
                                   batch_tile=128)
    out_f32 = jax.block_until_ready(out_f32)
    assert out_f32.shape == (B, 4)
    assert jnp.allclose(out_f32, ref, atol=1e-5, rtol=1e-5), "f32 mismatch"

    # --- default bf16-operand path (f32 accumulation), relaxed tolerance -----
    params_bf16 = prepare_params(weights, biases, use_bf16=True)
    out_bf16 = mlp_forward_prepared(x, params_bf16, activation_function)
    out_bf16 = jax.block_until_ready(out_bf16)
    assert out_bf16.shape == (B, 4)
    assert jnp.allclose(out_bf16, ref, atol=5e-2, rtol=5e-2), "bf16 mismatch"

    # --- softsign path exercising pl.reciprocal(approx=True) -----------------
    ref_ss = mlp_reference(x, weights, biases, 0)
    out_ss = mlp_forward_prepared(x, params_f32, 0, batch_tile=128)
    out_ss = jax.block_until_ready(out_ss)
    assert jnp.allclose(out_ss, ref_ss, atol=1e-2, rtol=1e-2), "softsign mismatch"

    print("KERNEL_OK")
</pallas_src>

<mosaic_0001>
module attributes {stable_mosaic.version = 11 : i64} {
  func.func @kernel(%arg0: i32, %arg1: memref<128x4xf32, #tpu.memory_space<vmem>>, %arg2: memref<4x128xf32, #tpu.memory_space<vmem>>, %arg3: memref<128x128xf32, #tpu.memory_space<vmem>>, %arg4: memref<128x128xf32, #tpu.memory_space<vmem>>, %arg5: memref<128x4xf32, #tpu.memory_space<vmem>>, %arg6: memref<1x128xf32, #tpu.memory_space<vmem>>, %arg7: memref<1x128xf32, #tpu.memory_space<vmem>>, %arg8: memref<1x128xf32, #tpu.memory_space<vmem>>, %arg9: memref<1x4xf32, #tpu.memory_space<vmem>>, %arg10: memref<128x4xf32, #tpu.memory_space<vmem>>) attributes {dimension_semantics = [#tpu.dimension_semantics<parallel>], iteration_bounds = array<i64: 3>, scalar_prefetch = 0 : i64, scratch_operands = 0 : i64, tpu.core_type = #tpu.core_type<tc>, window_params = [{transform_indices = @transform_0, window_bounds = array<i64: 128, 4>}, {pipeline_mode = #tpu.pipeline_mode<synchronous>, transform_indices = @transform_1, window_bounds = array<i64: 4, 128>}, {pipeline_mode = #tpu.pipeline_mode<synchronous>, transform_indices = @transform_2, window_bounds = array<i64: 128, 128>}, {pipeline_mode = #tpu.pipeline_mode<synchronous>, transform_indices = @transform_3, window_bounds = array<i64: 128, 128>}, {pipeline_mode = #tpu.pipeline_mode<synchronous>, transform_indices = @transform_4, window_bounds = array<i64: 128, 4>}, {pipeline_mode = #tpu.pipeline_mode<synchronous>, transform_indices = @transform_5, window_bounds = array<i64: 1, 128>}, {pipeline_mode = #tpu.pipeline_mode<synchronous>, transform_indices = @transform_6, window_bounds = array<i64: 1, 128>}, {pipeline_mode = #tpu.pipeline_mode<synchronous>, transform_indices = @transform_7, window_bounds = array<i64: 1, 128>}, {pipeline_mode = #tpu.pipeline_mode<synchronous>, transform_indices = @transform_8, window_bounds = array<i64: 1, 4>}, {transform_indices = @transform_9, window_bounds = array<i64: 128, 4>}]} {
    %c0 = arith.constant 0 : index
    %c0_0 = arith.constant 0 : index
    %0 = vector.load %arg1[%c0, %c0_0] : memref<128x4xf32, #tpu.memory_space<vmem>>, vector<128x4xf32>
    %c0_1 = arith.constant 0 : index
    %c0_2 = arith.constant 0 : index
    %1 = vector.load %arg2[%c0_1, %c0_2] : memref<4x128xf32, #tpu.memory_space<vmem>>, vector<4x128xf32>
    %cst = arith.constant dense<0.000000e+00> : vector<128x128xf32>
    %2 = tpu.matmul %0, %1, %cst {dimension_numbers = #tpu.dot_dimension_numbers<[1], [0], [0], [1], [0, 0, 1, 1], [], []>} : vector<128x4xf32>, vector<4x128xf32>, vector<128x128xf32> -> vector<128x128xf32>
    %c0_3 = arith.constant 0 : index
    %c0_4 = arith.constant 0 : index
    %3 = vector.load %arg6[%c0_3, %c0_4] : memref<1x128xf32, #tpu.memory_space<vmem>>, vector<1x128xf32>
    %4 = vector.broadcast %3 : vector<1x128xf32> to vector<128x128xf32>
    %5 = arith.addf %2, %4 : vector<128x128xf32>
    %6 = math.tanh %5 : vector<128x128xf32>
    %c0_5 = arith.constant 0 : index
    %c0_6 = arith.constant 0 : index
    %7 = vector.load %arg3[%c0_5, %c0_6] : memref<128x128xf32, #tpu.memory_space<vmem>>, vector<128x128xf32>
    %cst_7 = arith.constant dense<0.000000e+00> : vector<128x128xf32>
    %8 = tpu.matmul %6, %7, %cst_7 {dimension_numbers = #tpu.dot_dimension_numbers<[1], [0], [0], [1], [0, 0, 1, 1], [], []>} : vector<128x128xf32>, vector<128x128xf32>, vector<128x128xf32> -> vector<128x128xf32>
    %c0_8 = arith.constant 0 : index
    %c0_9 = arith.constant 0 : index
    %9 = vector.load %arg7[%c0_8, %c0_9] : memref<1x128xf32, #tpu.memory_space<vmem>>, vector<1x128xf32>
    %10 = vector.broadcast %9 : vector<1x128xf32> to vector<128x128xf32>
    %11 = arith.addf %8, %10 : vector<128x128xf32>
    %12 = math.tanh %11 : vector<128x128xf32>
    %c0_10 = arith.constant 0 : index
    %c0_11 = arith.constant 0 : index
    %13 = vector.load %arg4[%c0_10, %c0_11] : memref<128x128xf32, #tpu.memory_space<vmem>>, vector<128x128xf32>
    %cst_12 = arith.constant dense<0.000000e+00> : vector<128x128xf32>
    %14 = tpu.matmul %12, %13, %cst_12 {dimension_numbers = #tpu.dot_dimension_numbers<[1], [0], [0], [1], [0, 0, 1, 1], [], []>} : vector<128x128xf32>, vector<128x128xf32>, vector<128x128xf32> -> vector<128x128xf32>
    %c0_13 = arith.constant 0 : index
    %c0_14 = arith.constant 0 : index
    %15 = vector.load %arg8[%c0_13, %c0_14] : memref<1x128xf32, #tpu.memory_space<vmem>>, vector<1x128xf32>
    %16 = vector.broadcast %15 : vector<1x128xf32> to vector<128x128xf32>
    %17 = arith.addf %14, %16 : vector<128x128xf32>
    %18 = math.tanh %17 : vector<128x128xf32>
    %c0_15 = arith.constant 0 : index
    %c0_16 = arith.constant 0 : index
    %19 = vector.load %arg5[%c0_15, %c0_16] : memref<128x4xf32, #tpu.memory_space<vmem>>, vector<128x4xf32>
    %cst_17 = arith.constant dense<0.000000e+00> : vector<128x4xf32>
    %20 = tpu.matmul %18, %19, %cst_17 {dimension_numbers = #tpu.dot_dimension_numbers<[1], [0], [0], [1], [0, 0, 1, 1], [], []>} : vector<128x128xf32>, vector<128x4xf32>, vector<128x4xf32> -> vector<128x4xf32>
    %c0_18 = arith.constant 0 : index
    %c0_19 = arith.constant 0 : index
    %21 = vector.load %arg9[%c0_18, %c0_19] : memref<1x4xf32, #tpu.memory_space<vmem>>, vector<1x4xf32>
    %22 = vector.broadcast %21 : vector<1x4xf32> to vector<128x4xf32>
    %23 = arith.addf %20, %22 : vector<128x4xf32>
    %c0_20 = arith.constant 0 : index
    %c0_21 = arith.constant 0 : index
    %24 = vector.load %arg10[%c0_20, %c0_21] : memref<128x4xf32, #tpu.memory_space<vmem>>, vector<128x4xf32>
    tpu.vector_store %arg10[%c0_20, %c0_21], %23 {strides = array<i32>} : memref<128x4xf32, #tpu.memory_space<vmem>>, vector<128x4xf32>,
    return
  }
  func.func @transform_0(%arg0: i32) -> (i32, i32) {
    %c0_i32 = arith.constant 0 : i32
    %c0_i32_0 = arith.constant 0 : i32
    return %arg0, %c0_i32 : i32, i32
  }
  func.func @transform_1(%arg0: i32) -> (i32, i32) {
    %c0_i32 = arith.constant 0 : i32
    %c0_i32_0 = arith.constant 0 : i32
    %c0_i32_1 = arith.constant 0 : i32
    return %c0_i32, %c0_i32_0 : i32, i32
  }
  func.func @transform_2(%arg0: i32) -> (i32, i32) {
    %c0_i32 = arith.constant 0 : i32
    %c0_i32_0 = arith.constant 0 : i32
    %c0_i32_1 = arith.constant 0 : i32
    return %c0_i32, %c0_i32_0 : i32, i32
  }
  func.func @transform_3(%arg0: i32) -> (i32, i32) {
    %c0_i32 = arith.constant 0 : i32
    %c0_i32_0 = arith.constant 0 : i32
    %c0_i32_1 = arith.constant 0 : i32
    return %c0_i32, %c0_i32_0 : i32, i32
  }
  func.func @transform_4(%arg0: i32) -> (i32, i32) {
    %c0_i32 = arith.constant 0 : i32
    %c0_i32_0 = arith.constant 0 : i32
    %c0_i32_1 = arith.constant 0 : i32
    return %c0_i32, %c0_i32_0 : i32, i32
  }
  func.func @transform_5(%arg0: i32) -> (i32, i32) {
    %c0_i32 = arith.constant 0 : i32
    %c0_i32_0 = arith.constant 0 : i32
    %c0_i32_1 = arith.constant 0 : i32
    return %c0_i32, %c0_i32_0 : i32, i32
  }
  func.func @transform_6(%arg0: i32) -> (i32, i32) {
    %c0_i32 = arith.constant 0 : i32
    %c0_i32_0 = arith.constant 0 : i32
    %c0_i32_1 = arith.constant 0 : i32
    return %c0_i32, %c0_i32_0 : i32, i32
  }
  func.func @transform_7(%arg0: i32) -> (i32, i32) {
    %c0_i32 = arith.constant 0 : i32
    %c0_i32_0 = arith.constant 0 : i32
    %c0_i32_1 = arith.constant 0 : i32
    return %c0_i32, %c0_i32_0 : i32, i32
  }
  func.func @transform_8(%arg0: i32) -> (i32, i32) {
    %c0_i32 = arith.constant 0 : i32
    %c0_i32_0 = arith.constant 0 : i32
    %c0_i32_1 = arith.constant 0 : i32
    return %c0_i32, %c0_i32_0 : i32, i32
  }
  func.func @transform_9(%arg0: i32) -> (i32, i32) {
    %c0_i32 = arith.constant 0 : i32
    %c0_i32_0 = arith.constant 0 : i32
    return %arg0, %c0_i32 : i32, i32
  }
}

</mosaic_0001>

<llo_original>
// kernel: tpu_custom_call.1
$region0: #{tpu_custom_call.1}
  #allocation0 [shape = 'u32[]', space=smem, size = 0x4, offset = 0x4, fixed_abs, tag = 'smem constant byte address 0x4 - core index']
  #allocation1 [shape = 'u32[144,128]{1,0:T(1,128)}', space=vmem, size = 0x12000, scoped, tag = 'internal scratch']
  %s0 = inlined_call_operand.vmem [shape: f32[384,4], index: 0, kind: input, shape index: {}]
  %s1 = inlined_call_operand.vmem [shape: f32[4,128], index: 1, kind: input, shape index: {}]
  %s2 = inlined_call_operand.vmem [shape: f32[128,128], index: 2, kind: input, shape index: {}]
  %s3 = inlined_call_operand.vmem [shape: f32[128,128], index: 3, kind: input, shape index: {}]
  %s4 = inlined_call_operand.vmem [shape: f32[128,4], index: 4, kind: input, shape index: {}]
  %s5 = inlined_call_operand.vmem [shape: f32[1,128], index: 5, kind: input, shape index: {}]
  %s6 = inlined_call_operand.vmem [shape: f32[1,128], index: 6, kind: input, shape index: {}]
  %s7 = inlined_call_operand.vmem [shape: f32[1,128], index: 7, kind: input, shape index: {}]
  %s8 = inlined_call_operand.vmem [shape: f32[1,4], index: 8, kind: input, shape index: {}]
  %s9 = inlined_call_operand.vmem [shape: f32[384,4], index: 9, kind: output, shape index: {}]
  %s10 = sld [smem:[#allocation0]]
  $region69: #{tpu_custom_call.1} parent=0
    _
  %s12 = ssub.s32 1, %s10
  %s13 = scalar_select 0, %s12, %s10
  loop: start=0, step=1, limit=5
  $region2: #{tpu_custom_call.1} parent=0 // loop_pre_header
    _
  $region3: #{tpu_custom_call.1} parent=0 // loop_header
    %s15 = sphi 0, %s19
    %p16 = scmp.ge.s32.totalorder %s15, 5
    %s25 = sphi 0, %s27
    %s28 = sphi 0, %s25
    %s29 = sphi 0, %s28
    %s45 = sphi 0, %s29
    %s49 = sphi 0, %s49
    %s51 = sphi 0, %s49
    %s52 = sphi 0, %s51
    %s66 = sphi 0, %s52
    %s70 = sphi 0, %s70
    %s72 = sphi 0, %s70
    %s73 = sphi 0, %s72
    %s87 = sphi 0, %s73
    %s91 = sphi 0, %s91
    %s93 = sphi 0, %s91
    %s94 = sphi 0, %s93
    %s108 = sphi 0, %s94
    %s112 = sphi 0, %s112
    %s114 = sphi 0, %s112
    %s115 = sphi 0, %s114
    %s129 = sphi 0, %s115
    %s133 = sphi 0, %s133
    %s135 = sphi 0, %s133
    %s136 = sphi 0, %s135
    %s150 = sphi 0, %s136
    %s154 = sphi 0, %s154
    %s156 = sphi 0, %s154
    %s157 = sphi 0, %s156
    %s171 = sphi 0, %s157
    %s175 = sphi 0, %s175
    %s177 = sphi 0, %s175
    %s178 = sphi 0, %s177
    %s192 = sphi 0, %s178
    %s196 = sphi 0, %s196
    %s198 = sphi 0, %s196
    %s199 = sphi 0, %s198
    %s213 = sphi 0, %s199
    %s219 = sphi 0, %s221
    %s222 = sphi 0, %s219
    %s223 = sphi 0, %s222
    %s239 = sphi 0, %s223
  $region4: #{tpu_custom_call.1} parent=0 // loop_header_branch
    %18 = sbr.rel (%p16) target = $region8
  $region5: #{tpu_custom_call.1} parent=0 // loop_body
    %s20 = ssub.s32 %s15, 1
    %s21 = ssub.s32 %s15, 2
    %s22 = sadd.s32 %s15, 1
    %s23 = ssub.s32 %s15, %s22
    %p24 = scmp.eq.s32.totalorder %s23, 0
    %s26 = sadd.s32 %s25, 1
    %s27 = scalar_select %p24, %s25, %s26
    %p30 = pneg %p24
    %p31 = scmp.eq.s32.totalorder %s15, 2
    %p32 = por %p30, %p31
    %p33 = scmp.ne.s32.totalorder %s25, %s28
    %p34 = scmp.eq.s32.totalorder %s15, 0
    %p35 = por %p33, %p34
    %p36 = scmp.ne.s32.totalorder %s25, %s28
    %p37 = scmp.eq.s32.totalorder %s20, 2
    %p38 = por %p36, %p37
    %p39 = scmp.ne.s32.totalorder %s28, %s29
    %p40 = scmp.eq.s32.totalorder %s20, 0
    %p41 = por %p39, %p40
    %p42 = scmp.ne.s32.totalorder %s28, %s29
    %p43 = scmp.eq.s32.totalorder %s21, 2
    %p44 = por %p42, %p43
    %p46 = scmp.ne.s32.totalorder %s29, %s45
    %p47 = scmp.eq.s32.totalorder %s21, 0
    %p48 = por %p46, %p47
    %s50 = sadd.s32 %s49, 1
    %p53 = scmp.eq.s32.totalorder %s15, 2
    %p54 = scmp.ne.s32.totalorder %s49, %s51
    %p55 = scmp.eq.s32.totalorder %s15, 0
    %p56 = por %p54, %p55
    %p57 = scmp.ne.s32.totalorder %s49, %s51
    %p58 = scmp.eq.s32.totalorder %s20, 2
    %p59 = por %p57, %p58
    %p60 = scmp.ne.s32.totalorder %s51, %s52
    %p61 = scmp.eq.s32.totalorder %s20, 0
    %p62 = por %p60, %p61
    %p63 = scmp.ne.s32.totalorder %s51, %s52
    %p64 = scmp.eq.s32.totalorder %s21, 2
    %p65 = por %p63, %p64
    %p67 = scmp.ne.s32.totalorder %s52, %s66
    %p68 = scmp.eq.s32.totalorder %s21, 0
    %p69 = por %p67, %p68
    %s71 = sadd.s32 %s70, 1
    %p74 = scmp.eq.s32.totalorder %s15, 2
    %p75 = scmp.ne.s32.totalorder %s70, %s72
    %p76 = scmp.eq.s32.totalorder %s15, 0
    %p77 = por %p75, %p76
    %p78 = scmp.ne.s32.totalorder %s70, %s72
    %p79 = scmp.eq.s32.totalorder %s20, 2
    %p80 = por %p78, %p79
    %p81 = scmp.ne.s32.totalorder %s72, %s73
    %p82 = scmp.eq.s32.totalorder %s20, 0
    %p83 = por %p81, %p82
    %p84 = scmp.ne.s32.totalorder %s72, %s73
    %p85 = scmp.eq.s32.totalorder %s21, 2
    %p86 = por %p84, %p85
    %p88 = scmp.ne.s32.totalorder %s73, %s87
    %p89 = scmp.eq.s32.totalorder %s21, 0
    %p90 = por %p88, %p89
    %s92 = sadd.s32 %s91, 1
    %p95 = scmp.eq.s32.totalorder %s15, 2
    %p96 = scmp.ne.s32.totalorder %s91, %s93
    %p97 = scmp.eq.s32.totalorder %s15, 0
    %p98 = por %p96, %p97
    %p99 = scmp.ne.s32.totalorder %s91, %s93
    %p100 = scmp.eq.s32.totalorder %s20, 2
    %p101 = por %p99, %p100
    %p102 = scmp.ne.s32.totalorder %s93, %s94
    %p103 = scmp.eq.s32.totalorder %s20, 0
    %p104 = por %p102, %p103
    %p105 = scmp.ne.s32.totalorder %s93, %s94
    %p106 = scmp.eq.s32.totalorder %s21, 2
    %p107 = por %p105, %p106
    %p109 = scmp.ne.s32.totalorder %s94, %s108
    %p110 = scmp.eq.s32.totalorder %s21, 0
    %p111 = por %p109, %p110
    %s113 = sadd.s32 %s112, 1
    %p116 = scmp.eq.s32.totalorder %s15, 2
    %p117 = scmp.ne.s32.totalorder %s112, %s114
    %p118 = scmp.eq.s32.totalorder %s15, 0
    %p119 = por %p117, %p118
    %p120 = scmp.ne.s32.totalorder %s112, %s114
    %p121 = scmp.eq.s32.totalorder %s20, 2
    %p122 = por %p120, %p121
    %p123 = scmp.ne.s32.totalorder %s114, %s115
    %p124 = scmp.eq.s32.totalorder %s20, 0
    %p125 = por %p123, %p124
    %p126 = scmp.ne.s32.totalorder %s114, %s115
    %p127 = scmp.eq.s32.totalorder %s21, 2
    %p128 = por %p126, %p127
    %p130 = scmp.ne.s32.totalorder %s115, %s129
    %p131 = scmp.eq.s32.totalorder %s21, 0
    %p132 = por %p130, %p131
    %s134 = sadd.s32 %s133, 1
    %p137 = scmp.eq.s32.totalorder %s15, 2
    %p138 = scmp.ne.s32.totalorder %s133, %s135
    %p139 = scmp.eq.s32.totalorder %s15, 0
    %p140 = por %p138, %p139
    %p141 = scmp.ne.s32.totalorder %s133, %s135
    %p142 = scmp.eq.s32.totalorder %s20, 2
    %p143 = por %p141, %p142
    %p144 = scmp.ne.s32.totalorder %s135, %s136
    %p145 = scmp.eq.s32.totalorder %s20, 0
    %p146 = por %p144, %p145
    %p147 = scmp.ne.s32.totalorder %s135, %s136
    %p148 = scmp.eq.s32.totalorder %s21, 2
    %p149 = por %p147, %p148
    %p151 = scmp.ne.s32.totalorder %s136, %s150
    %p152 = scmp.eq.s32.totalorder %s21, 0
    %p153 = por %p151, %p152
    %s155 = sadd.s32 %s154, 1
    %p158 = scmp.eq.s32.totalorder %s15, 2
    %p159 = scmp.ne.s32.totalorder %s154, %s156
    %p160 = scmp.eq.s32.totalorder %s15, 0
    %p161 = por %p159, %p160
    %p162 = scmp.ne.s32.totalorder %s154, %s156
    %p163 = scmp.eq.s32.totalorder %s20, 2
    %p164 = por %p162, %p163
    %p165 = scmp.ne.s32.totalorder %s156, %s157
    %p166 = scmp.eq.s32.totalorder %s20, 0
    %p167 = por %p165, %p166
    %p168 = scmp.ne.s32.totalorder %s156, %s157
    %p169 = scmp.eq.s32.totalorder %s21, 2
    %p170 = por %p168, %p169
    %p172 = scmp.ne.s32.totalorder %s157, %s171
    %p173 = scmp.eq.s32.totalorder %s21, 0
    %p174 = por %p172, %p173
    %s176 = sadd.s32 %s175, 1
    %p179 = scmp.eq.s32.totalorder %s15, 2
    %p180 = scmp.ne.s32.totalorder %s175, %s177
    %p181 = scmp.eq.s32.totalorder %s15, 0
    %p182 = por %p180, %p181
    %p183 = scmp.ne.s32.totalorder %s175, %s177
    %p184 = scmp.eq.s32.totalorder %s20, 2
    %p185 = por %p183, %p184
    %p186 = scmp.ne.s32.totalorder %s177, %s178
    %p187 = scmp.eq.s32.totalorder %s20, 0
    %p188 = por %p186, %p187
    %p189 = scmp.ne.s32.totalorder %s177, %s178
    %p190 = scmp.eq.s32.totalorder %s21, 2
    %p191 = por %p189, %p190
    %p193 = scmp.ne.s32.totalorder %s178, %s192
    %p194 = scmp.eq.s32.totalorder %s21, 0
    %p195 = por %p193, %p194
    %s197 = sadd.s32 %s196, 1
    %p200 = scmp.eq.s32.totalorder %s15, 2
    %p201 = scmp.ne.s32.totalorder %s196, %s198
    %p202 = scmp.eq.s32.totalorder %s15, 0
    %p203 = por %p201, %p202
    %p204 = scmp.ne.s32.totalorder %s196, %s198
    %p205 = scmp.eq.s32.totalorder %s20, 2
    %p206 = por %p204, %p205
    %p207 = scmp.ne.s32.totalorder %s198, %s199
    %p208 = scmp.eq.s32.totalorder %s20, 0
    %p209 = por %p207, %p208
    %p210 = scmp.ne.s32.totalorder %s198, %s199
    %p211 = scmp.eq.s32.totalorder %s21, 2
    %p212 = por %p210, %p211
    %p214 = scmp.ne.s32.totalorder %s199, %s213
    %p215 = scmp.eq.s32.totalorder %s21, 0
    %p216 = por %p214, %p215
    %s217 = ssub.s32 %s15, %s22
    %p218 = scmp.eq.s32.totalorder %s217, 0
    %s220 = sadd.s32 %s219, 1
    %s221 = scalar_select %p218, %s219, %s220
    %p224 = pneg %p218
    %p225 = scmp.eq.s32.totalorder %s15, 2
    %p226 = por %p224, %p225
    %p227 = scmp.ne.s32.totalorder %s219, %s222
    %p228 = scmp.eq.s32.totalorder %s15, 0
    %p229 = por %p227, %p228
    %p230 = scmp.ne.s32.totalorder %s219, %s222
    %p231 = scmp.eq.s32.totalorder %s20, 2
    %p232 = por %p230, %p231
    %p233 = scmp.ne.s32.totalorder %s222, %s223
    %p234 = scmp.eq.s32.totalorder %s20, 0
    %p235 = por %p233, %p234
    %p236 = scmp.ne.s32.totalorder %s222, %s223
    %p237 = scmp.eq.s32.totalorder %s21, 2
    %p238 = por %p236, %p237
    %p240 = scmp.ne.s32.totalorder %s223, %s239
    %p241 = scmp.eq.s32.totalorder %s21, 0
    %p242 = por %p240, %p241
    %p243 = scmp.le.s32.totalorder 1, %s15
    %p244 = scmp.lt.s32.totalorder %s15, 4
    %p245 = pnand %p243, %p244
    %p246 = pneg %p245
    // Predicated region
    $region9: #{tpu_custom_call.1} parent=5 // pred_check
      _
    $region10: #{tpu_custom_call.1} parent=5 // pred_check_branch
      %248 = sbr.rel (%p245) target = $region12
    $region11: #{tpu_custom_call.1} parent=5 // pred_region
      %s249 = ssub.s32 %s15, 1
      // Predicated region
      $region13: #{tpu_custom_call.1} parent=11 // pred_check
        %p250 = pneg %p62
      $region14: #{tpu_custom_call.1} parent=11 // pred_check_branch
        %252 = sbr.rel (%p250) target = $region16
      $region15: #{tpu_custom_call.1} parent=11 // pred_region
        _
      $region16: #{tpu_custom_call.1} parent=11 // pred_fallthru
        _
      // Predicated region
      $region17: #{tpu_custom_call.1} parent=11 // pred_check
        %p253 = pneg %p83
      $region18: #{tpu_custom_call.1} parent=11 // pred_check_branch
        %255 = sbr.rel (%p253) target = $region20
      $region19: #{tpu_custom_call.1} parent=11 // pred_region
        _
      $region20: #{tpu_custom_call.1} parent=11 // pred_fallthru
        _
      // Predicated region
      $region21: #{tpu_custom_call.1} parent=11 // pred_check
        %p256 = pneg %p104
      $region22: #{tpu_custom_call.1} parent=11 // pred_check_branch
        %258 = sbr.rel (%p256) target = $region24
      $region23: #{tpu_custom_call.1} parent=11 // pred_region
        _
      $region24: #{tpu_custom_call.1} parent=11 // pred_fallthru
        _
      // Predicated region
      $region25: #{tpu_custom_call.1} parent=11 // pred_check
        %p259 = pneg %p125
      $region26: #{tpu_custom_call.1} parent=11 // pred_check_branch
        %261 = sbr.rel (%p259) target = $region28
      $region27: #{tpu_custom_call.1} parent=11 // pred_region
        _
      $region28: #{tpu_custom_call.1} parent=11 // pred_fallthru
        _
      // Predicated region
      $region29: #{tpu_custom_call.1} parent=11 // pred_check
        %p262 = pneg %p146
      $region30: #{tpu_custom_call.1} parent=11 // pred_check_branch
        %264 = sbr.rel (%p262) target = $region32
      $region31: #{tpu_custom_call.1} parent=11 // pred_region
        _
      $region32: #{tpu_custom_call.1} parent=11 // pred_fallthru
        _
      // Predicated region
      $region33: #{tpu_custom_call.1} parent=11 // pred_check
        %p265 = pneg %p167
      $region34: #{tpu_custom_call.1} parent=11 // pred_check_branch
        %267 = sbr.rel (%p265) target = $region36
      $region35: #{tpu_custom_call.1} parent=11 // pred_region
        _
      $region36: #{tpu_custom_call.1} parent=11 // pred_fallthru
        _
      // Predicated region
      $region37: #{tpu_custom_call.1} parent=11 // pred_check
        %p268 = pneg %p188
      $region38: #{tpu_custom_call.1} parent=11 // pred_check_branch
        %270 = sbr.rel (%p268) target = $region40
      $region39: #{tpu_custom_call.1} parent=11 // pred_region
        _
      $region40: #{tpu_custom_call.1} parent=11 // pred_fallthru
        _
      // Predicated region
      $region41: #{tpu_custom_call.1} parent=11 // pred_check
        %p271 = pneg %p209
      $region42: #{tpu_custom_call.1} parent=11 // pred_check_branch
        %273 = sbr.rel (%p271) target = $region44
      $region43: #{tpu_custom_call.1} parent=11 // pred_region
        _
      $region44: #{tpu_custom_call.1} parent=11 // pred_fallthru
        _
    $region12: #{tpu_custom_call.1} parent=5 // pred_fallthru
      _
    %p274 = scmp.lt.s32.totalorder %s15, 3
    // Predicated region
    $region45: #{tpu_custom_call.1} parent=5 // pred_check
      %p275 = pneg %p274
    $region46: #{tpu_custom_call.1} parent=5 // pred_check_branch
      %277 = sbr.rel (%p275) target = $region48
    $region47: #{tpu_custom_call.1} parent=5 // pred_region
      // Predicated region
      $region49: #{tpu_custom_call.1} parent=47 // pred_check
        %p278 = pneg %p35
      $region50: #{tpu_custom_call.1} parent=47 // pred_check_branch
        %280 = sbr.rel (%p278) target = $region52
      $region51: #{tpu_custom_call.1} parent=47 // pred_region
        %s281 = smul.u32 16, %s15
        %p282 = scmp.lt.s32.totalorder %s281, 47
        %s283 = scalar_select %p282, %s281, 47
        %s284 = smul.addr %s283, 8
        %s285 = scalar_lea.vmem %s0, %s284
        %s286 = smul.u32 16, %s15
      $region52: #{tpu_custom_call.1} parent=47 // pred_fallthru
        _
    $region48: #{tpu_custom_call.1} parent=5 // pred_fallthru
      _
    %p287 = scmp.le.s32.totalorder 1, %s15
    %p288 = scmp.lt.s32.totalorder %s15, 4
    %p289 = pnand %p287, %p288
    %p290 = pneg %p289
    // Predicated region
    $region53: #{tpu_custom_call.1} parent=5 // pred_check
      _
    $region54: #{tpu_custom_call.1} parent=5 // pred_check_branch
      %292 = sbr.rel (%p289) target = $region56
    $region55: #{tpu_custom_call.1} parent=5 // pred_region
      %s293 = ssub.s32 %s15, 1
      %s294 = smul.u32 16, %s20
      %p295 = scmp.lt.s32.totalorder %s294, 47
      %s296 = scalar_select %p295, %s294, 47
      %s297 = smul.addr %s296, 8
      %s298 = scalar_lea.vmem %s0, %s297
      %p299 = pneg %p41
      %p300 = pneg %p38
      %p301 = pneg %p62
      %p302 = pneg %p59
      %p303 = pneg %p83
      %p304 = pneg %p80
      %p305 = pneg %p104
      %p306 = pneg %p101
      %p307 = pneg %p125
      %p308 = pneg %p122
      %p309 = pneg %p146
      %p310 = pneg %p143
      %p311 = pneg %p167
      %p312 = pneg %p164
      %p313 = pneg %p188
      %p314 = pneg %p185
      %p315 = pneg %p209
      %p316 = pneg %p206
      %p317 = pneg %p235
      %p318 = pneg %p232
      %s319 = smul.u32 16, %s20
      %p320 = scmp.lt.s32.totalorder %s319, 47
      %s321 = scalar_select %p320, %s319, 47
      %s322 = smul.addr %s321, 8
      %s323 = scalar_lea.vmem %s9, %s322
      %s324 = smul.u32 16, %s20
      %p325 = scmp.lt.s32.totalorder %s324, 47
      %s326 = scalar_select %p325, %s324, 47
      %s327 = smul.addr %s326, 8
      %s328 = scalar_lea.vmem %s0, %s327
      %s329 = smul.u32 16, %s20
      %s330 = smul.u32 16, %s20
      %p331 = scmp.lt.s32.totalorder %s330, 47
      %s332 = scalar_select %p331, %s330, 47
      %s333 = smul.addr %s332, 8
      %s334 = scalar_lea.vmem %s9, %s333
      %s335 = smul.u32 16, %s20
      %v336 = vld [vmem:[%s328] sm:$0xff]
      %v337 = vld [vmem:[%s328 + $0x8] sm:$0xff]
      %v338 = vld [vmem:[%s328 + $0x10] sm:$0xff]
      %v339 = vld [vmem:[%s328 + $0x18] sm:$0xff]
      %v340 = vld [vmem:[%s328 + $0x20] sm:$0xff]
      %v341 = vld [vmem:[%s328 + $0x28] sm:$0xff]
      %v342 = vld [vmem:[%s328 + $0x30] sm:$0xff]
      %v343 = vld [vmem:[%s328 + $0x38] sm:$0xff]
      %v344 = vld [vmem:[%s328 + $0x40] sm:$0xff]
      %v345 = vld [vmem:[%s328 + $0x48] sm:$0xff]
      %v346 = vld [vmem:[%s328 + $0x50] sm:$0xff]
      %v347 = vld [vmem:[%s328 + $0x58] sm:$0xff]
      %v348 = vld [vmem:[%s328 + $0x60] sm:$0xff]
      %v349 = vld [vmem:[%s328 + $0x68] sm:$0xff]
      %v350 = vld [vmem:[%s328 + $0x70] sm:$0xff]
      %v351 = vld [vmem:[%s328 + $0x78] sm:$0xff]
      %v352 = vld [vmem:[%s1] sm:$0xf]
      %v353 = vld [vmem:[%s5] sm:$0x1]
      %v355 = vlaneseq
      %v356 = vshrl.u32 %v355, 7
      %v357 = vsub.s32 0, %v356
      %v358 = vrot.slane %v353, %v357
      %vm360 = vcmask 31744
      %v362 = vsel %vm360, %v336, 0
      %v365 = vsel %vm360, %v337, 0
      %v368 = vsel %vm360, %v338, 0
      %v371 = vsel %vm360, %v339, 0
      %v374 = vsel %vm360, %v340, 0
      %v377 = vsel %vm360, %v341, 0
      %v380 = vsel %vm360, %v342, 0
      %v383 = vsel %vm360, %v343, 0
      %v386 = vsel %vm360, %v344, 0
      %v389 = vsel %vm360, %v345, 0
      %v392 = vsel %vm360, %v346, 0
      %v395 = vsel %vm360, %v347, 0
      %v398 = vsel %vm360, %v348, 0
      %v401 = vsel %vm360, %v349, 0
      %v404 = vsel %vm360, %v350, 0
      %v407 = vsel %vm360, %v351, 0
      %vm409 = vcmask 1043456
      %v411 = vsel %vm409, %v352, 0
      %413 = vmatprep.subr.mxu0 0.0
      %414 = vmatpush1.msra.mxu0 %v411
      %415 = vmatprep.subr.mxu0 0.0
      %416 = vmatpush1.msra.mxu0 0.0
      %417 = vmatprep.subr.mxu0 0.0
      %418 = vmatpush1.msra.mxu0 0.0
      %419 = vmatprep.subr.mxu0 0.0
      %420 = vmatpush1.msra.mxu0 0.0
      %421 = vmatprep.subr.mxu0 0.0
      %422 = vmatpush1.msra.mxu0 0.0
      %423 = vmatprep.subr.mxu0 0.0
      %424 = vmatpush1.msra.mxu0 0.0
      %425 = vmatprep.subr.mxu0 0.0
      %426 = vmatpush1.msra.mxu0 0.0
      %427 = vmatprep.subr.mxu0 0.0
      %428 = vmatpush1.msra.mxu0 0.0
      %429 = vmatprep.subr.mxu0 0.0
      %430 = vmatpush1.msra.mxu0 0.0
      %431 = vmatprep.subr.mxu0 0.0
      %432 = vmatpush1.msra.mxu0 0.0
      %433 = vmatprep.subr.mxu0 0.0
      %434 = vmatpush1.msra.mxu0 0.0
      %435 = vmatprep.subr.mxu0 0.0
      %436 = vmatpush1.msra.mxu0 0.0
      %437 = vmatprep.subr.mxu0 0.0
      %438 = vmatpush1.msra.mxu0 0.0
      %439 = vmatprep.subr.mxu0 0.0
      %440 = vmatpush1.msra.mxu0 0.0
      %441 = vmatprep.subr.mxu0 0.0
      %442 = vmatpush1.msra.mxu0 0.0
      %443 = vmatprep.subr.mxu0 0.0
      %444 = vmatpush1.msra.mxu0 0.0
      %445 = vmatprep.subr.mxu0 0.0
      %446 = vmatpush1.msra.mxu0 0.0
      %447 = vmatprep.subr.mxu0 0.0
      %448 = vmatpush1.msra.mxu0 0.0
      %449 = vmatprep.subr.mxu0 0.0
      %450 = vmatpush1.msra.mxu0 0.0
      %451 = vmatprep.subr.mxu0 0.0
      %452 = vmatpush1.msra.mxu0 0.0
      %453 = vmatprep.subr.mxu0 0.0
      %454 = vmatpush1.msra.mxu0 0.0
      %455 = vmatprep.subr.mxu0 0.0
      %456 = vmatpush1.msra.mxu0 0.0
      %457 = vmatprep.subr.mxu0 0.0
      %458 = vmatpush1.msra.mxu0 0.0
      %459 = vmatprep.subr.mxu0 0.0
      %460 = vmatpush1.msra.mxu0 0.0
      %461 = vmatprep.subr.mxu0 0.0
      %462 = vmatpush1.msra.mxu0 0.0
      %463 = vmatprep.subr.mxu0 0.0
      %464 = vmatpush1.msra.mxu0 0.0
      %465 = vmatprep.subr.mxu0 0.0
      %466 = vmatpush1.msra.mxu0 0.0
      %467 = vmatprep.subr.mxu0 0.0
      %468 = vmatpush1.msra.mxu0 0.0
      %469 = vmatprep.subr.mxu0 0.0
      %470 = vmatpush1.msra.mxu0 0.0
      %471 = vmatprep.subr.mxu0 0.0
      %472 = vmatpush1.msra.mxu0 0.0
      %473 = vmatprep.subr.mxu0 0.0
      %474 = vmatpush1.msra.mxu0 0.0
      %475 = vmatprep.subr.mxu0 0.0
      %476 = vmatpush1.msra.mxu0 0.0
      %477 = vmatprep.mubr.f32.mxu0 0.0
      %478 = vmatmul.mubr.f32.gmra.mrb[0].mxu0 %v362
      %v479 = vpop.f32.mrb[0].mxu0
      %v480 = vadd.f32 %v358, %v479
      %v481 = vpop.f32.mrb[0].mxu0
      %482 = vmatprep.mubr.f32.mxu0 0.0
      %483 = vmatmul.mubr.f32.gmra.mrb[0].mxu0 %v365
      %v484 = vpop.f32.mrb[0].mxu0
      %v485 = vadd.f32 %v358, %v484
      %v486 = vpop.f32.mrb[0].mxu0
      %487 = vmatprep.mubr.f32.mxu0 0.0
      %488 = vmatmul.mubr.f32.gmra.mrb[0].mxu0 %v368
      %v489 = vpop.f32.mrb[0].mxu0
      %v490 = vadd.f32 %v358, %v489
      %v491 = vpop.f32.mrb[0].mxu0
      %492 = vmatprep.mubr.f32.mxu0 0.0
      %493 = vmatmul.mubr.f32.gmra.mrb[0].mxu0 %v371
      %v494 = vpop.f32.mrb[0].mxu0
      %v495 = vadd.f32 %v358, %v494
      %v496 = vpop.f32.mrb[0].mxu0
      %497 = vmatprep.mubr.f32.mxu0 0.0
      %498 = vmatmul.mubr.f32.gmra.mrb[0].mxu0 %v374
      %v499 = vpop.f32.mrb[0].mxu0
      %v500 = vadd.f32 %v358, %v499
      %v501 = vpop.f32.mrb[0].mxu0
      %502 = vmatprep.mubr.f32.mxu0 0.0
      %503 = vmatmul.mubr.f32.gmra.mrb[0].mxu0 %v377
      %v504 = vpop.f32.mrb[0].mxu0
      %v505 = vadd.f32 %v358, %v504
      %v506 = vpop.f32.mrb[0].mxu0
      %507 = vmatprep.mubr.f32.mxu0 0.0
      %508 = vmatmul.mubr.f32.gmra.mrb[0].mxu0 %v380
      %v509 = vpop.f32.mrb[0].mxu0
      %v510 = vadd.f32 %v358, %v509
      %v511 = vpop.f32.mrb[0].mxu0
      %512 = vmatprep.mubr.f32.mxu0 0.0
      %513 = vmatmul.mubr.f32.gmra.mrb[0].mxu0 %v383
      %v514 = vpop.f32.mrb[0].mxu0
      %v515 = vadd.f32 %v358, %v514
      %v516 = vpop.f32.mrb[0].mxu0
      %517 = vmatprep.mubr.f32.mxu0 0.0
      %518 = vmatmul.mubr.f32.gmra.mrb[0].mxu0 %v386
      %v519 = vpop.f32.mrb[0].mxu0
      %v520 = vadd.f32 %v358, %v519
      %v521 = vpop.f32.mrb[0].mxu0
      %522 = vmatprep.mubr.f32.mxu0 0.0
      %523 = vmatmul.mubr.f32.gmra.mrb[0].mxu0 %v389
      %v524 = vpop.f32.mrb[0].mxu0
      %v525 = vadd.f32 %v358, %v524
      %v526 = vpop.f32.mrb[0].mxu0
      %527 = vmatprep.mubr.f32.mxu0 0.0
      %528 = vmatmul.mubr.f32.gmra.mrb[0].mxu0 %v392
      %v529 = vpop.f32.mrb[0].mxu0
      %v530 = vadd.f32 %v358, %v529
      %v531 = vpop.f32.mrb[0].mxu0
      %532 = vmatprep.mubr.f32.mxu0 0.0
      %533 = vmatmul.mubr.f32.gmra.mrb[0].mxu0 %v395
      %v534 = vpop.f32.mrb[0].mxu0
      %v535 = vadd.f32 %v358, %v534
      %v536 = vpop.f32.mrb[0].mxu0
      %537 = vmatprep.mubr.f32.mxu0 0.0
      %538 = vmatmul.mubr.f32.gmra.mrb[0].mxu0 %v398
      %v539 = vpop.f32.mrb[0].mxu0
      %v540 = vadd.f32 %v358, %v539
      %v541 = vpop.f32.mrb[0].mxu0
      %542 = vmatprep.mubr.f32.mxu0 0.0
      %543 = vmatmul.mubr.f32.gmra.mrb[0].mxu0 %v401
      %v544 = vpop.f32.mrb[0].mxu0
      %v545 = vadd.f32 %v358, %v544
      %v546 = vpop.f32.mrb[0].mxu0
      %547 = vmatprep.mubr.f32.mxu0 0.0
      %548 = vmatmul.mubr.f32.gmra.mrb[0].mxu0 %v404
      %v549 = vpop.f32.mrb[0].mxu0
      %v550 = vadd.f32 %v358, %v549
      %v551 = vpop.f32.mrb[0].mxu0
      %552 = vmatprep.mubr.f32.mxu0 0.0
      %553 = vmatmul.mubr.f32.gmra.mrb[0].mxu0 %v407
      %v554 = vpop.f32.mrb[0].mxu0
      %v555 = vadd.f32 %v358, %v554
      %v556 = vpop.f32.mrb[0].mxu0
      %557 = vdwg.mxu0
      %v558 = vtanh.pop %v480
      %v559 = vtanh.pop %v485
      %v560 = vtanh.pop %v490
      %v561 = vtanh.pop %v495
      %v562 = vtanh.pop %v500
      %v563 = vtanh.pop %v505
      %v564 = vtanh.pop %v510
      %v565 = vtanh.pop %v515
      %v566 = vtanh.pop %v520
      %v567 = vtanh.pop %v525
      %v568 = vtanh.pop %v530
      %v569 = vtanh.pop %v535
      %v570 = vtanh.pop %v540
      %v571 = vtanh.pop %v545
      %v572 = vtanh.pop %v550
      %v573 = vtanh.pop %v555
      %v574 = vld [vmem:[%s2] sm:$0xff]
      %v575 = vld [vmem:[%s2 + $0x8] sm:$0xff]
      %v576 = vld [vmem:[%s2 + $0x10] sm:$0xff]
      %v577 = vld [vmem:[%s2 + $0x18] sm:$0xff]
      %v578 = vld [vmem:[%s2 + $0x20] sm:$0xff]
      %v579 = vld [vmem:[%s2 + $0x28] sm:$0xff]
      %v580 = vld [vmem:[%s2 + $0x30] sm:$0xff]
      %v581 = vld [vmem:[%s2 + $0x38] sm:$0xff]
      %v582 = vld [vmem:[%s2 + $0x40] sm:$0xff]
      %v583 = vld [vmem:[%s2 + $0x48] sm:$0xff]
      %v584 = vld [vmem:[%s2 + $0x50] sm:$0xff]
      %v585 = vld [vmem:[%s2 + $0x58] sm:$0xff]
      %v586 = vld [vmem:[%s2 + $0x60] sm:$0xff]
      %v587 = vld [vmem:[%s2 + $0x68] sm:$0xff]
      %v588 = vld [vmem:[%s2 + $0x70] sm:$0xff]
      %v589 = vld [vmem:[%s2 + $0x78] sm:$0xff]
      %v590 = vld [vmem:[%s6] sm:$0x1]
      %v592 = vlaneseq
      %v593 = vshrl.u32 %v592, 7
      %v594 = vsub.s32 0, %v593
      %v595 = vrot.slane %v590, %v594
      %597 = vmatprep.subr.mxu0 0.0
      %598 = vmatpush1.msra.mxu0 %v574
      %599 = vmatprep.subr.mxu0 0.0
      %600 = vmatpush1.msra.mxu0 %v575
      %601 = vmatprep.subr.mxu0 0.0
      %602 = vmatpush1.msra.mxu0 %v576
      %603 = vmatprep.subr.mxu0 0.0
      %604 = vmatpush1.msra.mxu0 %v577
      %605 = vmatprep.subr.mxu0 0.0
      %606 = vmatpush1.msra.mxu0 %v578
      %607 = vmatprep.subr.mxu0 0.0
      %608 = vmatpush1.msra.mxu0 %v579
      %609 = vmatprep.subr.mxu0 0.0
      %610 = vmatpush1.msra.mxu0 %v580
      %611 = vmatprep.subr.mxu0 0.0
      %612 = vmatpush1.msra.mxu0 %v581
      %613 = vmatprep.subr.mxu0 0.0
      %614 = vmatpush1.msra.mxu0 %v582
      %615 = vmatprep.subr.mxu0 0.0
      %616 = vmatpush1.msra.mxu0 %v583
      %617 = vmatprep.subr.mxu0 0.0
      %618 = vmatpush1.msra.mxu0 %v584
      %619 = vmatprep.subr.mxu0 0.0
      %620 = vmatpush1.msra.mxu0 %v585
      %621 = vmatprep.subr.mxu0 0.0
      %622 = vmatpush1.msra.mxu0 %v586
      %623 = vmatprep.subr.mxu0 0.0
      %624 = vmatpush1.msra.mxu0 %v587
      %625 = vmatprep.subr.mxu0 0.0
      %626 = vmatpush1.msra.mxu0 %v588
      %627 = vmatprep.subr.mxu0 0.0
      %628 = vmatpush1.msra.mxu0 %v589
      %629 = vmatprep.subr.mxu0 0.0
      %630 = vmatpush1.msra.mxu0 0.0
      %631 = vmatprep.subr.mxu0 0.0
      %632 = vmatpush1.msra.mxu0 0.0
      %633 = vmatprep.subr.mxu0 0.0
      %634 = vmatpush1.msra.mxu0 0.0
      %635 = vmatprep.subr.mxu0 0.0
      %636 = vmatpush1.msra.mxu0 0.0
      %637 = vmatprep.subr.mxu0 0.0
      %638 = vmatpush1.msra.mxu0 0.0
      %639 = vmatprep.subr.mxu0 0.0
      %640 = vmatpush1.msra.mxu0 0.0
      %641 = vmatprep.subr.mxu0 0.0
      %642 = vmatpush1.msra.mxu0 0.0
      %643 = vmatprep.subr.mxu0 0.0
      %644 = vmatpush1.msra.mxu0 0.0
      %645 = vmatprep.subr.mxu0 0.0
      %646 = vmatpush1.msra.mxu0 0.0
      %647 = vmatprep.subr.mxu0 0.0
      %648 = vmatpush1.msra.mxu0 0.0
      %649 = vmatprep.subr.mxu0 0.0
      %650 = vmatpush1.msra.mxu0 0.0
      %651 = vmatprep.subr.mxu0 0.0
      %652 = vmatpush1.msra.mxu0 0.0
      %653 = vmatprep.subr.mxu0 0.0
      %654 = vmatpush1.msra.mxu0 0.0
      %655 = vmatprep.subr.mxu0 0.0
      %656 = vmatpush1.msra.mxu0 0.0
      %657 = vmatprep.subr.mxu0 0.0
      %658 = vmatpush1.msra.mxu0 0.0
      %659 = vmatprep.subr.mxu0 0.0
      %660 = vmatpush1.msra.mxu0 0.0
      %661 = vmatprep.mubr.f32.mxu0 0.0
      %662 = vmatmul.mubr.f32.gmra.mrb[0].mxu0 %v558
      %v663 = vpop.f32.mrb[0].mxu0
      %v664 = vadd.f32 %v595, %v663
      %v665 = vpop.f32.mrb[0].mxu0
      %666 = vmatprep.mubr.f32.mxu0 0.0
      %667 = vmatmul.mubr.f32.gmra.mrb[0].mxu0 %v559
      %v668 = vpop.f32.mrb[0].mxu0
      %v669 = vadd.f32 %v595, %v668
      %v670 = vpop.f32.mrb[0].mxu0
      %671 = vmatprep.mubr.f32.mxu0 0.0
      %672 = vmatmul.mubr.f32.gmra.mrb[0].mxu0 %v560
      %v673 = vpop.f32.mrb[0].mxu0
      %v674 = vadd.f32 %v595, %v673
      %v675 = vpop.f32.mrb[0].mxu0
      %676 = vmatprep.mubr.f32.mxu0 0.0
      %677 = vmatmul.mubr.f32.gmra.mrb[0].mxu0 %v561
      %v678 = vpop.f32.mrb[0].mxu0
      %v679 = vadd.f32 %v595, %v678
      %v680 = vpop.f32.mrb[0].mxu0
      %681 = vmatprep.mubr.f32.mxu0 0.0
      %682 = vmatmul.mubr.f32.gmra.mrb[0].mxu0 %v562
      %v683 = vpop.f32.mrb[0].mxu0
      %v684 = vadd.f32 %v595, %v683
      %v685 = vpop.f32.mrb[0].mxu0
      %686 = vmatprep.mubr.f32.mxu0 0.0
      %687 = vmatmul.mubr.f32.gmra.mrb[0].mxu0 %v563
      %v688 = vpop.f32.mrb[0].mxu0
      %v689 = vadd.f32 %v595, %v688
      %v690 = vpop.f32.mrb[0].mxu0
      %691 = vmatprep.mubr.f32.mxu0 0.0
      %692 = vmatmul.mubr.f32.gmra.mrb[0].mxu0 %v564
      %v693 = vpop.f32.mrb[0].mxu0
      %v694 = vadd.f32 %v595, %v693
      %v695 = vpop.f32.mrb[0].mxu0
      %696 = vmatprep.mubr.f32.mxu0 0.0
      %697 = vmatmul.mubr.f32.gmra.mrb[0].mxu0 %v565
      %v698 = vpop.f32.mrb[0].mxu0
      %v699 = vadd.f32 %v595, %v698
      %v700 = vpop.f32.mrb[0].mxu0
      %701 = vmatprep.mubr.f32.mxu0 0.0
      %702 = vmatmul.mubr.f32.gmra.mrb[0].mxu0 %v566
      %v703 = vpop.f32.mrb[0].mxu0
      %v704 = vadd.f32 %v595, %v703
      %v705 = vpop.f32.mrb[0].mxu0
      %706 = vmatprep.mubr.f32.mxu0 0.0
      %707 = vmatmul.mubr.f32.gmra.mrb[0].mxu0 %v567
      %v708 = vpop.f32.mrb[0].mxu0
      %v709 = vadd.f32 %v595, %v708
      %v710 = vpop.f32.mrb[0].mxu0
      %711 = vmatprep.mubr.f32.mxu0 0.0
      %712 = vmatmul.mubr.f32.gmra.mrb[0].mxu0 %v568
      %v713 = vpop.f32.mrb[0].mxu0
      %v714 = vadd.f32 %v595, %v713
      %v715 = vpop.f32.mrb[0].mxu0
      %716 = vmatprep.mubr.f32.mxu0 0.0
      %717 = vmatmul.mubr.f32.gmra.mrb[0].mxu0 %v569
      %v718 = vpop.f32.mrb[0].mxu0
      %v719 = vadd.f32 %v595, %v718
      %v720 = vpop.f32.mrb[0].mxu0
      %721 = vmatprep.mubr.f32.mxu0 0.0
      %722 = vmatmul.mubr.f32.gmra.mrb[0].mxu0 %v570
      %v723 = vpop.f32.mrb[0].mxu0
      %v724 = vadd.f32 %v595, %v723
      %v725 = vpop.f32.mrb[0].mxu0
      %726 = vmatprep.mubr.f32.mxu0 0.0
      %727 = vmatmul.mubr.f32.gmra.mrb[0].mxu0 %v571
      %v728 = vpop.f32.mrb[0].mxu0
      %v729 = vadd.f32 %v595, %v728
      %v730 = vpop.f32.mrb[0].mxu0
      %731 = vmatprep.mubr.f32.mxu0 0.0
      %732 = vmatmul.mubr.f32.gmra.mrb[0].mxu0 %v572
      %v733 = vpop.f32.mrb[0].mxu0
      %v734 = vadd.f32 %v595, %v733
      %v735 = vpop.f32.mrb[0].mxu0
      %736 = vmatprep.mubr.f32.mxu0 0.0
      %737 = vmatmul.mubr.f32.gmra.mrb[0].mxu0 %v573
      %v738 = vpop.f32.mrb[0].mxu0
      %v739 = vadd.f32 %v595, %v738
      %v740 = vpop.f32.mrb[0].mxu0
      %741 = vdwg.mxu0
      %v742 = vtanh.pop %v664
      %v743 = vtanh.pop %v669
      %v744 = vtanh.pop %v674
      %v745 = vtanh.pop %v679
      %v746 = vtanh.pop %v684
      %v747 = vtanh.pop %v689
      %v748 = vtanh.pop %v694
      %v749 = vtanh.pop %v699
      %v750 = vtanh.pop %v704
      %v751 = vtanh.pop %v709
      %v752 = vtanh.pop %v714
      %v753 = vtanh.pop %v719
      %v754 = vtanh.pop %v724
      %v755 = vtanh.pop %v729
      %v756 = vtanh.pop %v734
      %v757 = vtanh.pop %v739
      %v758 = vld [vmem:[%s3] sm:$0xff]
      %v759 = vld [vmem:[%s3 + $0x8] sm:$0xff]
      %v760 = vld [vmem:[%s3 + $0x10] sm:$0xff]
      %v761 = vld [vmem:[%s3 + $0x18] sm:$0xff]
      %v762 = vld [vmem:[%s3 + $0x20] sm:$0xff]
      %v763 = vld [vmem:[%s3 + $0x28] sm:$0xff]
      %v764 = vld [vmem:[%s3 + $0x30] sm:$0xff]
      %v765 = vld [vmem:[%s3 + $0x38] sm:$0xff]
      %v766 = vld [vmem:[%s3 + $0x40] sm:$0xff]
      %v767 = vld [vmem:[%s3 + $0x48] sm:$0xff]
      %v768 = vld [vmem:[%s3 + $0x50] sm:$0xff]
      %v769 = vld [vmem:[%s3 + $0x58] sm:$0xff]
      %v770 = vld [vmem:[%s3 + $0x60] sm:$0xff]
      %v771 = vld [vmem:[%s3 + $0x68] sm:$0xff]
      %v772 = vld [vmem:[%s3 + $0x70] sm:$0xff]
      %v773 = vld [vmem:[%s3 + $0x78] sm:$0xff]
      %v774 = vld [vmem:[%s7] sm:$0x1]
      %v776 = vlaneseq
      %v777 = vshrl.u32 %v776, 7
      %v778 = vsub.s32 0, %v777
      %v779 = vrot.slane %v774, %v778
      %781 = vmatprep.subr.mxu0 0.0
      %782 = vmatpush1.msra.mxu0 %v758
      %783 = vmatprep.subr.mxu0 0.0
      %784 = vmatpush1.msra.mxu0 %v759
      %785 = vmatprep.subr.mxu0 0.0
      %786 = vmatpush1.msra.mxu0 %v760
      %787 = vmatprep.subr.mxu0 0.0
      %788 = vmatpush1.msra.mxu0 %v761
      %789 = vmatprep.subr.mxu0 0.0
      %790 = vmatpush1.msra.mxu0 %v762
      %791 = vmatprep.subr.mxu0 0.0
      %792 = vmatpush1.msra.mxu0 %v763
      %793 = vmatprep.subr.mxu0 0.0
      %794 = vmatpush1.msra.mxu0 %v764
      %795 = vmatprep.subr.mxu0 0.0
      %796 = vmatpush1.msra.mxu0 %v765
      %797 = vmatprep.subr.mxu0 0.0
      %798 = vmatpush1.msra.mxu0 %v766
      %799 = vmatprep.subr.mxu0 0.0
      %800 = vmatpush1.msra.mxu0 %v767
      %801 = vmatprep.subr.mxu0 0.0
      %802 = vmatpush1.msra.mxu0 %v768
      %803 = vmatprep.subr.mxu0 0.0
      %804 = vmatpush1.msra.mxu0 %v769
      %805 = vmatprep.subr.mxu0 0.0
      %806 = vmatpush1.msra.mxu0 %v770
      %807 = vmatprep.subr.mxu0 0.0
      %808 = vmatpush1.msra.mxu0 %v771
      %809 = vmatprep.subr.mxu0 0.0
      %810 = vmatpush1.msra.mxu0 %v772
      %811 = vmatprep.subr.mxu0 0.0
      %812 = vmatpush1.msra.mxu0 %v773
      %813 = vmatprep.subr.mxu0 0.0
      %814 = vmatpush1.msra.mxu0 0.0
      %815 = vmatprep.subr.mxu0 0.0
      %816 = vmatpush1.msra.mxu0 0.0
      %817 = vmatprep.subr.mxu0 0.0
      %818 = vmatpush1.msra.mxu0 0.0
      %819 = vmatprep.subr.mxu0 0.0
      %820 = vmatpush1.msra.mxu0 0.0
      %821 = vmatprep.subr.mxu0 0.0
      %822 = vmatpush1.msra.mxu0 0.0
      %823 = vmatprep.subr.mxu0 0.0
      %824 = vmatpush1.msra.mxu0 0.0
      %825 = vmatprep.subr.mxu0 0.0
      %826 = vmatpush1.msra.mxu0 0.0
      %827 = vmatprep.subr.mxu0 0.0
      %828 = vmatpush1.msra.mxu0 0.0
      %829 = vmatprep.subr.mxu0 0.0
      %830 = vmatpush1.msra.mxu0 0.0
      %831 = vmatprep.subr.mxu0 0.0
      %832 = vmatpush1.msra.mxu0 0.0
      %833 = vmatprep.subr.mxu0 0.0
      %834 = vmatpush1.msra.mxu0 0.0
      %835 = vmatprep.subr.mxu0 0.0
      %836 = vmatpush1.msra.mxu0 0.0
      %837 = vmatprep.subr.mxu0 0.0
      %838 = vmatpush1.msra.mxu0 0.0
      %839 = vmatprep.subr.mxu0 0.0
      %840 = vmatpush1.msra.mxu0 0.0
      %841 = vmatprep.subr.mxu0 0.0
      %842 = vmatpush1.msra.mxu0 0.0
      %843 = vmatprep.subr.mxu0 0.0
      %844 = vmatpush1.msra.mxu0 0.0
      %845 = vmatprep.mubr.f32.mxu0 0.0
      %846 = vmatmul.mubr.f32.gmra.mrb[0].mxu0 %v742
      %v847 = vpop.f32.mrb[0].mxu0
      %v848 = vadd.f32 %v779, %v847
      %v849 = vpop.f32.mrb[0].mxu0
      %850 = vmatprep.mubr.f32.mxu0 0.0
      %851 = vmatmul.mubr.f32.gmra.mrb[0].mxu0 %v743
      %v852 = vpop.f32.mrb[0].mxu0
      %v853 = vadd.f32 %v779, %v852
      %v854 = vpop.f32.mrb[0].mxu0
      %855 = vmatprep.mubr.f32.mxu0 0.0
      %856 = vmatmul.mubr.f32.gmra.mrb[0].mxu0 %v744
      %v857 = vpop.f32.mrb[0].mxu0
      %v858 = vadd.f32 %v779, %v857
      %v859 = vpop.f32.mrb[0].mxu0
      %860 = vmatprep.mubr.f32.mxu0 0.0
      %861 = vmatmul.mubr.f32.gmra.mrb[0].mxu0 %v745
      %v862 = vpop.f32.mrb[0].mxu0
      %v863 = vadd.f32 %v779, %v862
      %v864 = vpop.f32.mrb[0].mxu0
      %865 = vmatprep.mubr.f32.mxu0 0.0
      %866 = vmatmul.mubr.f32.gmra.mrb[0].mxu0 %v746
      %v867 = vpop.f32.mrb[0].mxu0
      %v868 = vadd.f32 %v779, %v867
      %v869 = vpop.f32.mrb[0].mxu0
      %870 = vmatprep.mubr.f32.mxu0 0.0
      %871 = vmatmul.mubr.f32.gmra.mrb[0].mxu0 %v747
      %v872 = vpop.f32.mrb[0].mxu0
      %v873 = vadd.f32 %v779, %v872
      %v874 = vpop.f32.mrb[0].mxu0
      %875 = vmatprep.mubr.f32.mxu0 0.0
      %876 = vmatmul.mubr.f32.gmra.mrb[0].mxu0 %v748
      %v877 = vpop.f32.mrb[0].mxu0
      %v878 = vadd.f32 %v779, %v877
      %v879 = vpop.f32.mrb[0].mxu0
      %880 = vmatprep.mubr.f32.mxu0 0.0
      %881 = vmatmul.mubr.f32.gmra.mrb[0].mxu0 %v749
      %v882 = vpop.f32.mrb[0].mxu0
      %v883 = vadd.f32 %v779, %v882
      %v884 = vpop.f32.mrb[0].mxu0
      %885 = vmatprep.mubr.f32.mxu0 0.0
      %886 = vmatmul.mubr.f32.gmra.mrb[0].mxu0 %v750
      %v887 = vpop.f32.mrb[0].mxu0
      %v888 = vadd.f32 %v779, %v887
      %v889 = vpop.f32.mrb[0].mxu0
      %890 = vmatprep.mubr.f32.mxu0 0.0
      %891 = vmatmul.mubr.f32.gmra.mrb[0].mxu0 %v751
      %v892 = vpop.f32.mrb[0].mxu0
      %v893 = vadd.f32 %v779, %v892
      %v894 = vpop.f32.mrb[0].mxu0
      %895 = vmatprep.mubr.f32.mxu0 0.0
      %896 = vmatmul.mubr.f32.gmra.mrb[0].mxu0 %v752
      %v897 = vpop.f32.mrb[0].mxu0
      %v898 = vadd.f32 %v779, %v897
      %v899 = vpop.f32.mrb[0].mxu0
      %900 = vmatprep.mubr.f32.mxu0 0.0
      %901 = vmatmul.mubr.f32.gmra.mrb[0].mxu0 %v753
      %v902 = vpop.f32.mrb[0].mxu0
      %v903 = vadd.f32 %v779, %v902
      %v904 = vpop.f32.mrb[0].mxu0
      %905 = vmatprep.mubr.f32.mxu0 0.0
      %906 = vmatmul.mubr.f32.gmra.mrb[0].mxu0 %v754
      %v907 = vpop.f32.mrb[0].mxu0
      %v908 = vadd.f32 %v779, %v907
      %v909 = vpop.f32.mrb[0].mxu0
      %910 = vmatprep.mubr.f32.mxu0 0.0
      %911 = vmatmul.mubr.f32.gmra.mrb[0].mxu0 %v755
      %v912 = vpop.f32.mrb[0].mxu0
      %v913 = vadd.f32 %v779, %v912
      %v914 = vpop.f32.mrb[0].mxu0
      %915 = vmatprep.mubr.f32.mxu0 0.0
      %916 = vmatmul.mubr.f32.gmra.mrb[0].mxu0 %v756
      %v917 = vpop.f32.mrb[0].mxu0
      %v918 = vadd.f32 %v779, %v917
      %v919 = vpop.f32.mrb[0].mxu0
      %920 = vmatprep.mubr.f32.mxu0 0.0
      %921 = vmatmul.mubr.f32.gmra.mrb[0].mxu0 %v757
      %v922 = vpop.f32.mrb[0].mxu0
      %v923 = vadd.f32 %v779, %v922
      %v924 = vpop.f32.mrb[0].mxu0
      %925 = vdwg.mxu0
      %v926 = vtanh.pop %v848
      %v927 = vtanh.pop %v853
      %v928 = vtanh.pop %v858
      %v929 = vtanh.pop %v863
      %v930 = vtanh.pop %v868
      %v931 = vtanh.pop %v873
      %v932 = vtanh.pop %v878
      %v933 = vtanh.pop %v883
      %v934 = vtanh.pop %v888
      %v935 = vtanh.pop %v893
      %v936 = vtanh.pop %v898
      %v937 = vtanh.pop %v903
      %v938 = vtanh.pop %v908
      %v939 = vtanh.pop %v913
      %v940 = vtanh.pop %v918
      %v941 = vtanh.pop %v923
      %v942 = vld [vmem:[%s4] sm:$0xff]
      %v943 = vld [vmem:[%s4 + $0x8] sm:$0xff]
      %v944 = vld [vmem:[%s4 + $0x10] sm:$0xff]
      %v945 = vld [vmem:[%s4 + $0x18] sm:$0xff]
      %v946 = vld [vmem:[%s4 + $0x20] sm:$0xff]
      %v947 = vld [vmem:[%s4 + $0x28] sm:$0xff]
      %v948 = vld [vmem:[%s4 + $0x30] sm:$0xff]
      %v949 = vld [vmem:[%s4 + $0x38] sm:$0xff]
      %v950 = vld [vmem:[%s4 + $0x40] sm:$0xff]
      %v951 = vld [vmem:[%s4 + $0x48] sm:$0xff]
      %v952 = vld [vmem:[%s4 + $0x50] sm:$0xff]
      %v953 = vld [vmem:[%s4 + $0x58] sm:$0xff]
      %v954 = vld [vmem:[%s4 + $0x60] sm:$0xff]
      %v955 = vld [vmem:[%s4 + $0x68] sm:$0xff]
      %v956 = vld [vmem:[%s4 + $0x70] sm:$0xff]
      %v957 = vld [vmem:[%s4 + $0x78] sm:$0xff]
      %v958 = vld [vmem:[%s8] sm:$0x1]
      %v960 = vlaneseq
      %v961 = vshrl.u32 %v960, 7
      %v962 = vsub.s32 0, %v961
      %v963 = vrot.slane %v958, %v962
      %965 = vmatprep.subr.mxu0 0.0
      %966 = vmatpush1.msra.mxu0 %v942
      %967 = vmatprep.subr.mxu0 0.0
      %968 = vmatpush1.msra.mxu0 %v943
      %969 = vmatprep.subr.mxu0 0.0
      %970 = vmatpush1.msra.mxu0 %v944
      %971 = vmatprep.subr.mxu0 0.0
      %972 = vmatpush1.msra.mxu0 %v945
      %973 = vmatprep.subr.mxu0 0.0
      %974 = vmatpush1.msra.mxu0 %v946
      %975 = vmatprep.subr.mxu0 0.0
      %976 = vmatpush1.msra.mxu0 %v947
      %977 = vmatprep.subr.mxu0 0.0
      %978 = vmatpush1.msra.mxu0 %v948
      %979 = vmatprep.subr.mxu0 0.0
      %980 = vmatpush1.msra.mxu0 %v949
      %981 = vmatprep.subr.mxu0 0.0
      %982 = vmatpush1.msra.mxu0 %v950
      %983 = vmatprep.subr.mxu0 0.0
      %984 = vmatpush1.msra.mxu0 %v951
      %985 = vmatprep.subr.mxu0 0.0
      %986 = vmatpush1.msra.mxu0 %v952
      %987 = vmatprep.subr.mxu0 0.0
      %988 = vmatpush1.msra.mxu0 %v953
      %989 = vmatprep.subr.mxu0 0.0
      %990 = vmatpush1.msra.mxu0 %v954
      %991 = vmatprep.subr.mxu0 0.0
      %992 = vmatpush1.msra.mxu0 %v955
      %993 = vmatprep.subr.mxu0 0.0
      %994 = vmatpush1.msra.mxu0 %v956
      %995 = vmatprep.subr.mxu0 0.0
      %996 = vmatpush1.msra.mxu0 %v957
      %997 = vmatprep.subr.mxu0 0.0
      %998 = vmatpush1.msra.mxu0 0.0
      %999 = vmatprep.subr.mxu0 0.0
      %1000 = vmatpush1.msra.mxu0 0.0
      %1001 = vmatprep.subr.mxu0 0.0
      %1002 = vmatpush1.msra.mxu0 0.0
      %1003 = vmatprep.subr.mxu0 0.0
      %1004 = vmatpush1.msra.mxu0 0.0
      %1005 = vmatprep.subr.mxu0 0.0
      %1006 = vmatpush1.msra.mxu0 0.0
      %1007 = vmatprep.subr.mxu0 0.0
      %1008 = vmatpush1.msra.mxu0 0.0
      %1009 = vmatprep.subr.mxu0 0.0
      %1010 = vmatpush1.msra.mxu0 0.0
      %1011 = vmatprep.subr.mxu0 0.0
      %1012 = vmatpush1.msra.mxu0 0.0
      %1013 = vmatprep.subr.mxu0 0.0
      %1014 = vmatpush1.msra.mxu0 0.0
      %1015 = vmatprep.subr.mxu0 0.0
      %1016 = vmatpush1.msra.mxu0 0.0
      %1017 = vmatprep.subr.mxu0 0.0
      %1018 = vmatpush1.msra.mxu0 0.0
      %1019 = vmatprep.subr.mxu0 0.0
      %1020 = vmatpush1.msra.mxu0 0.0
      %1021 = vmatprep.subr.mxu0 0.0
      %1022 = vmatpush1.msra.mxu0 0.0
      %1023 = vmatprep.subr.mxu0 0.0
      %1024 = vmatpush1.msra.mxu0 0.0
      %1025 = vmatprep.subr.mxu0 0.0
      %1026 = vmatpush1.msra.mxu0 0.0
      %1027 = vmatprep.subr.mxu0 0.0
      %1028 = vmatpush1.msra.mxu0 0.0
      %1029 = vmatprep.mubr.f32.mxu0 0.0
      %1030 = vmatmul.mubr.f32.gmra.mrb[0].mxu0 %v926
      %v1031 = vpop.f32.mrb[0].mxu0
      %v1032 = vadd.f32 %v963, %v1031
      %v1033 = vpop.f32.mrb[0].mxu0
      %1034 = vmatprep.mubr.f32.mxu0 0.0
      %1035 = vmatmul.mubr.f32.gmra.mrb[0].mxu0 %v927
      %v1036 = vpop.f32.mrb[0].mxu0
      %v1037 = vadd.f32 %v963, %v1036
      %v1038 = vpop.f32.mrb[0].mxu0
      %1039 = vmatprep.mubr.f32.mxu0 0.0
      %1040 = vmatmul.mubr.f32.gmra.mrb[0].mxu0 %v928
      %v1041 = vpop.f32.mrb[0].mxu0
      %v1042 = vadd.f32 %v963, %v1041
      %v1043 = vpop.f32.mrb[0].mxu0
      %1044 = vmatprep.mubr.f32.mxu0 0.0
      %1045 = vmatmul.mubr.f32.gmra.mrb[0].mxu0 %v929
      %v1046 = vpop.f32.mrb[0].mxu0
      %v1047 = vadd.f32 %v963, %v1046
      %v1048 = vpop.f32.mrb[0].mxu0
      %1049 = vmatprep.mubr.f32.mxu0 0.0
      %1050 = vmatmul.mubr.f32.gmra.mrb[0].mxu0 %v930
      %v1051 = vpop.f32.mrb[0].mxu0
      %v1052 = vadd.f32 %v963, %v1051
      %v1053 = vpop.f32.mrb[0].mxu0
      %1054 = vmatprep.mubr.f32.mxu0 0.0
      %1055 = vmatmul.mubr.f32.gmra.mrb[0].mxu0 %v931
      %v1056 = vpop.f32.mrb[0].mxu0
      %v1057 = vadd.f32 %v963, %v1056
      %v1058 = vpop.f32.mrb[0].mxu0
      %1059 = vmatprep.mubr.f32.mxu0 0.0
      %1060 = vmatmul.mubr.f32.gmra.mrb[0].mxu0 %v932
      %v1061 = vpop.f32.mrb[0].mxu0
      %v1062 = vadd.f32 %v963, %v1061
      %v1063 = vpop.f32.mrb[0].mxu0
      %1064 = vmatprep.mubr.f32.mxu0 0.0
      %1065 = vmatmul.mubr.f32.gmra.mrb[0].mxu0 %v933
      %v1066 = vpop.f32.mrb[0].mxu0
      %v1067 = vadd.f32 %v963, %v1066
      %v1068 = vpop.f32.mrb[0].mxu0
      %1069 = vmatprep.mubr.f32.mxu0 0.0
      %1070 = vmatmul.mubr.f32.gmra.mrb[0].mxu0 %v934
      %v1071 = vpop.f32.mrb[0].mxu0
      %v1072 = vadd.f32 %v963, %v1071
      %v1073 = vpop.f32.mrb[0].mxu0
      %1074 = vmatprep.mubr.f32.mxu0 0.0
      %1075 = vmatmul.mubr.f32.gmra.mrb[0].mxu0 %v935
      %v1076 = vpop.f32.mrb[0].mxu0
      %v1077 = vadd.f32 %v963, %v1076
      %v1078 = vpop.f32.mrb[0].mxu0
      %1079 = vmatprep.mubr.f32.mxu0 0.0
      %1080 = vmatmul.mubr.f32.gmra.mrb[0].mxu0 %v936
      %v1081 = vpop.f32.mrb[0].mxu0
      %v1082 = vadd.f32 %v963, %v1081
      %v1083 = vpop.f32.mrb[0].mxu0
      %1084 = vmatprep.mubr.f32.mxu0 0.0
      %1085 = vmatmul.mubr.f32.gmra.mrb[0].mxu0 %v937
      %v1086 = vpop.f32.mrb[0].mxu0
      %v1087 = vadd.f32 %v963, %v1086
      %v1088 = vpop.f32.mrb[0].mxu0
      %1089 = vmatprep.mubr.f32.mxu0 0.0
      %1090 = vmatmul.mubr.f32.gmra.mrb[0].mxu0 %v938
      %v1091 = vpop.f32.mrb[0].mxu0
      %v1092 = vadd.f32 %v963, %v1091
      %v1093 = vpop.f32.mrb[0].mxu0
      %1094 = vmatprep.mubr.f32.mxu0 0.0
      %1095 = vmatmul.mubr.f32.gmra.mrb[0].mxu0 %v939
      %v1096 = vpop.f32.mrb[0].mxu0
      %v1097 = vadd.f32 %v963, %v1096
      %v1098 = vpop.f32.mrb[0].mxu0
      %1099 = vmatprep.mubr.f32.mxu0 0.0
      %1100 = vmatmul.mubr.f32.gmra.mrb[0].mxu0 %v940
      %v1101 = vpop.f32.mrb[0].mxu0
      %v1102 = vadd.f32 %v963, %v1101
      %v1103 = vpop.f32.mrb[0].mxu0
      %1104 = vmatprep.mubr.f32.mxu0 0.0
      %1105 = vmatmul.mubr.f32.gmra.mrb[0].mxu0 %v941
      %v1106 = vpop.f32.mrb[0].mxu0
      %v1107 = vadd.f32 %v963, %v1106
      %v1108 = vpop.f32.mrb[0].mxu0
      %1109 = vdwg.mxu0
      %1110 = vst.msk [vmem:[%s334] sm:$0xff] %vm360, %v1032
      %1111 = vst.msk [vmem:[%s334 + $0x8] sm:$0xff] %vm360, %v1037
      %1112 = vst.msk [vmem:[%s334 + $0x10] sm:$0xff] %vm360, %v1042
      %1113 = vst.msk [vmem:[%s334 + $0x18] sm:$0xff] %vm360, %v1047
      %1114 = vst.msk [vmem:[%s334 + $0x20] sm:$0xff] %vm360, %v1052
      %1115 = vst.msk [vmem:[%s334 + $0x28] sm:$0xff] %vm360, %v1057
      %1116 = vst.msk [vmem:[%s334 + $0x30] sm:$0xff] %vm360, %v1062
      %1117 = vst.msk [vmem:[%s334 + $0x38] sm:$0xff] %vm360, %v1067
      %1118 = vst.msk [vmem:[%s334 + $0x40] sm:$0xff] %vm360, %v1072
      %1119 = vst.msk [vmem:[%s334 + $0x48] sm:$0xff] %vm360, %v1077
      %1120 = vst.msk [vmem:[%s334 + $0x50] sm:$0xff] %vm360, %v1082
      %1121 = vst.msk [vmem:[%s334 + $0x58] sm:$0xff] %vm360, %v1087
      %1122 = vst.msk [vmem:[%s334 + $0x60] sm:$0xff] %vm360, %v1092
      %1123 = vst.msk [vmem:[%s334 + $0x68] sm:$0xff] %vm360, %v1097
      %1124 = vst.msk [vmem:[%s334 + $0x70] sm:$0xff] %vm360, %v1102
      %1125 = vst.msk [vmem:[%s334 + $0x78] sm:$0xff] %vm360, %v1107
      %s1126 = smul.u32 16, %s20
      %p1127 = scmp.lt.s32.totalorder %s1126, 47
      %s1128 = scalar_select %p1127, %s1126, 47
      %s1129 = smul.addr %s1128, 8
      %s1130 = scalar_lea.vmem %s9, %s1129
      // Predicated region
      $region57: #{tpu_custom_call.1} parent=55 // pred_check
        %p1131 = pneg %p232
      $region58: #{tpu_custom_call.1} parent=55 // pred_check_branch
        %1133 = sbr.rel (%p1131) target = $region60
      $region59: #{tpu_custom_call.1} parent=55 // pred_region
        %s1134 = smul.u32 16, %s20
      $region60: #{tpu_custom_call.1} parent=55 // pred_fallthru
        _
    $region56: #{tpu_custom_call.1} parent=5 // pred_fallthru
      _
    %p1135 = scmp.le.s32.totalorder 2, %s15
    // Predicated region
    $region61: #{tpu_custom_call.1} parent=5 // pred_check
      %p1136 = pneg %p1135
    $region62: #{tpu_custom_call.1} parent=5 // pred_check_branch
      %1138 = sbr.rel (%p1136) target = $region64
    $region63: #{tpu_custom_call.1} parent=5 // pred_region
      %s1139 = ssub.s32 %s15, 2
      // Predicated region
      $region65: #{tpu_custom_call.1} parent=63 // pred_check
        %p1140 = pneg %p238
      $region66: #{tpu_custom_call.1} parent=63 // pred_check_branch
        %1142 = sbr.rel (%p1140) target = $region68
      $region67: #{tpu_custom_call.1} parent=63 // pred_region
        %s1143 = smul.u32 16, %s21
        %p1144 = scmp.lt.s32.totalorder %s1143, 47
        %s1145 = scalar_select %p1144, %s1143, 47
        %s1146 = smul.addr %s1145, 8
        %s1147 = scalar_lea.vmem %s9, %s1146
      $region68: #{tpu_custom_call.1} parent=63 // pred_fallthru
        _
    $region64: #{tpu_custom_call.1} parent=5 // pred_fallthru
      _
  $region6: #{tpu_custom_call.1} parent=0 // loop_footer
    %s19 = sadd.s32 1, %s15
  $region7: #{tpu_custom_call.1} parent=0 // loop_footer_branch
    %14 = sbr.rel target = $region3
  $region8: #{tpu_custom_call.1} parent=0 // loop_exit
    _

</llo_original>
